<compile_context>
chip_gen: v5e
topology: v5e:2x2
jax: 0.10.0
libtpu: 0.0.40
codegen_flags: <defaults>
</compile_context>

<pallas_src>
import functools

import jax
import jax.numpy as jnp
import numpy as np
from jax.experimental import pallas as pl
from jax.experimental.pallas import tpu as pltpu


def _round_up(x, m):
    return (x + m - 1) // m * m


def _basic_block_kernel(x_ref, dww_ref, pww_ref, pwb_ref, o_ref, xpad_ref,
                        *, NB, H, W, Cin, Cout, BASE):
    """Fused depthwise-3x3 + pointwise-1x1 + ReLU for NB batch elements.

    x_ref   : (NB, Cin, H*W)   flat NCHW input block (no host-side padding)
    dww_ref : (Cin, 9)         depthwise taps (f32), tap index t = kh*3 + kw
    pww_ref : (Cout, Cin)      pointwise weights (bf16 MXU operand)
    pwb_ref : (Cout, 1)        effective bias = pw_b + pw_w @ dw_b   (f32)
    o_ref   : (NB, Cout, H*W)  flat NCHW output (lane-dense)
    xpad_ref: (NB, Cin, L)     VMEM scratch; per-image row-padded flat halo,
                               x[h, w] lives at lane BASE + h*W + w.
    """
    HW = H * W
    L = xpad_ref.shape[-1]

    # --- halo scratch -------------------------------------------------------
    # Zero only the head/tail halo lanes; the interior [BASE, BASE+HW) is
    # fully overwritten every step and the halo is never written elsewhere.
    xpad_ref[:, :, :BASE] = jnp.zeros((NB, Cin, BASE), jnp.float32)
    xpad_ref[:, :, BASE + HW:] = jnp.zeros((NB, Cin, L - BASE - HW),
                                           jnp.float32)
    # Lane-aligned interior store (BASE is a multiple of 128 -> unmasked vst).
    xpad_ref[:, :, BASE:BASE + HW] = x_ref[...].astype(jnp.float32)

    dww = dww_ref[...].astype(jnp.float32)          # (Cin, 9), read once

    # Edge-column validity masks built in-kernel (no HBM mask input).
    col = jax.lax.broadcasted_iota(jnp.int32, (1, HW), 1) % W
    mask_l = (col >= 1).astype(jnp.float32)         # kw=0 reads column w-1
    mask_r = (col <= W - 2).astype(jnp.float32)     # kw=2 reads column w+1

    # --- depthwise 3x3 on the VPU (f32) -------------------------------------
    # 9 statically-shifted slices of the flat halo image. Vertical shifts are
    # exact flat offsets of W; horizontal shifts wrap at row boundaries and
    # the wrapped columns are zeroed once per kw-group (2 mask multiplies).
    accs = []
    for b in range(NB):
        acc = jnp.zeros((Cin, HW), jnp.float32)
        for kw in range(3):
            part = jnp.zeros((Cin, HW), jnp.float32)
            for kh in range(3):
                t = kh * 3 + kw
                s = BASE - (W + 1) + kh * W + kw
                part = part + xpad_ref[b, :, s:s + HW] * dww[:, t:t + 1]
            if kw == 0:
                part = part * mask_l
            elif kw == 2:
                part = part * mask_r
            acc = acc + part
        accs.append(acc)

    # Lane-concatenate the batch so the pointwise conv is one MXU matmul with
    # a long N dimension: (Cout, Cin) @ (Cin, NB*H*W).
    acc_all = accs[0] if NB == 1 else jnp.concatenate(accs, axis=-1)

    # --- pointwise 1x1 on the MXU (bf16 operands, f32 accumulate) -----------
    y = jnp.dot(pww_ref[...], acc_all.astype(jnp.bfloat16),
                preferred_element_type=jnp.float32)          # (Cout, NB*HW)
    y = y + pwb_ref[...].astype(jnp.float32)                 # (Cout, 1)
    y = jnp.maximum(y, 0.0).astype(o_ref.dtype)              # ReLU

    # Lane-dense output stores (HW is a multiple of 128 here).
    for b in range(NB):
        o_ref[b] = y[:, b * HW:(b + 1) * HW]


def _pick_batch_block(n):
    """Largest divisor of n that still leaves >=2 grid steps (v7x 2 TCs)."""
    if n < 2:
        return max(n, 1)
    best = 1
    for d in range(1, n // 2 + 1):
        if n % d == 0:
            best = d
    return best


def basic_block_forward(x_nchw, dw_w, dw_b, pw_w, pw_b, *, batch_block=None):
    """x_nchw: (N, Cin, H, W). Weights in PyTorch conv layout:
       dw_w: (Cin, 1, 3, 3), dw_b: (Cin,), pw_w: (Cout, Cin, 1, 1), pw_b: (Cout,).
    Returns (N, Cout, H, W)."""
    N, Cin, H, W = x_nchw.shape
    Cout = pw_w.shape[0]
    assert dw_w.shape == (Cin, 1, 3, 3), "depthwise conv must be 3x3, groups=Cin"
    assert pw_w.shape == (Cout, Cin, 1, 1), "pointwise conv must be 1x1"
    HW = H * W

    NB = _pick_batch_block(N) if batch_block is None else batch_block
    assert N % NB == 0, "batch block must divide N"

    # Flat NCHW view of the input (pure metadata reshape, no HBM traffic).
    x_flat = x_nchw.reshape(N, Cin, HW)

    dww = dw_w[:, 0, :, :].reshape(Cin, 9).astype(jnp.float32)   # tap = kh*3+kw
    pww = pw_w[:, :, 0, 0]                                       # (Cout, Cin)
    # Fold the depthwise bias into the pointwise bias:
    #   pw(dw_conv(x) + dw_b) + pw_b == pw(dw_conv(x)) + (pww @ dw_b + pw_b)
    pwb_eff = (pw_b.astype(jnp.float32)
               + pww.astype(jnp.float32) @ dw_b.astype(jnp.float32)
               ).reshape(Cout, 1)
    pww_bf16 = pww.astype(jnp.bfloat16)                          # MXU operand

    BASE = _round_up(W + 1, 128)        # lane-aligned start of the interior
    L = BASE + HW + W + 1               # covers all 9 shifted tap windows

    kernel = functools.partial(_basic_block_kernel, NB=NB, H=H, W=W,
                               Cin=Cin, Cout=Cout, BASE=BASE)

    out_flat = pl.pallas_call(
        kernel,
        out_shape=jax.ShapeDtypeStruct((N, Cout, HW), x_nchw.dtype),
        grid_spec=pltpu.PrefetchScalarGridSpec(
            num_scalar_prefetch=0,
            grid=(N // NB,),
            in_specs=[
                pl.BlockSpec((NB, Cin, HW), lambda n: (n, 0, 0)),
                pl.BlockSpec((Cin, 9), lambda n: (0, 0)),
                pl.BlockSpec((Cout, Cin), lambda n: (0, 0)),
                pl.BlockSpec((Cout, 1), lambda n: (0, 0)),
            ],
            out_specs=pl.BlockSpec((NB, Cout, HW), lambda n: (n, 0, 0)),
            scratch_shapes=[pltpu.VMEM((NB, Cin, L), jnp.float32)],
        ),
        compiler_params=pltpu.CompilerParams(
            dimension_semantics=("parallel",)),
    )(x_flat, dww, pww_bf16, pwb_eff)

    return out_flat.reshape(N, Cout, H, W)   # free reshape back to NCHW


def basic_block_reference(x_nchw, dw_w, dw_b, pw_w, pw_b):
    """Pure-JAX reference (lax conv) matching the PyTorch forward (eval mode)."""
    Cin = x_nchw.shape[1]
    y = jax.lax.conv_general_dilated(
        x_nchw, dw_w, window_strides=(1, 1), padding=((1, 1), (1, 1)),
        dimension_numbers=("NCHW", "OIHW", "NCHW"), feature_group_count=Cin)
    y = y + dw_b.reshape(1, -1, 1, 1)
    y = jax.lax.conv_general_dilated(
        y, pw_w, window_strides=(1, 1), padding=((0, 0), (0, 0)),
        dimension_numbers=("NCHW", "OIHW", "NCHW"))
    y = y + pw_b.reshape(1, -1, 1, 1)
    return jnp.maximum(y, 0.0)


if __name__ == "__main__":
    # N=4 exercises the batch-blocked path: NB=2 images per grid step and
    # 2 "parallel" grid steps (both v7x TensorCores busy).
    N, Cin, Cout, H, W = 4, 4, 8, 16, 16

    key = jax.random.PRNGKey(0)
    kx, k1, k2, k3, k4 = jax.random.split(key, 5)

    x = jax.random.normal(kx, (N, Cin, H, W), dtype=jnp.float32)
    # Deterministic parameter init (uniform in [-0.5, 0.5]), PyTorch conv shapes.
    dw_w = jax.random.uniform(k1, (Cin, 1, 3, 3), jnp.float32, -0.5, 0.5)
    dw_b = jax.random.uniform(k2, (Cin,), jnp.float32, -0.5, 0.5)
    pw_w = jax.random.uniform(k3, (Cout, Cin, 1, 1), jnp.float32, -0.5, 0.5)
    pw_b = jax.random.uniform(k4, (Cout,), jnp.float32, -0.5, 0.5)

    out = basic_block_forward(x, dw_w, dw_b, pw_w, pw_b)
    out = jax.block_until_ready(out)

    ref = basic_block_reference(x, dw_w, dw_b, pw_w, pw_b)
    # Tolerance accommodates the bf16 MXU operands (f32 accumulation);
    # structural bugs would show O(0.1-1) errors, far above this.
    np.testing.assert_allclose(np.asarray(out), np.asarray(ref),
                               rtol=1e-2, atol=1e-2)

    print("KERNEL_OK")
</pallas_src>

<mosaic_0001>
module attributes {stable_mosaic.version = 11 : i64} {
  func.func @_basic_block_kernel(%arg0: i32, %arg1: memref<2x4x256xf32, #tpu.memory_space<vmem>>, %arg2: memref<4x9xf32, #tpu.memory_space<vmem>>, %arg3: memref<8x4xbf16, #tpu.memory_space<vmem>>, %arg4: memref<8x1xf32, #tpu.memory_space<vmem>>, %arg5: memref<2x8x256xf32, #tpu.memory_space<vmem>>, %arg6: memref<2x4x401xf32, #tpu.memory_space<vmem>>) attributes {dimension_semantics = [#tpu.dimension_semantics<parallel>], iteration_bounds = array<i64: 2>, scalar_prefetch = 0 : i64, scratch_operands = 1 : i64, tpu.core_type = #tpu.core_type<tc>, window_params = [{transform_indices = @transform_0, window_bounds = array<i64: 2, 4, 256>}, {pipeline_mode = #tpu.pipeline_mode<synchronous>, transform_indices = @transform_1, window_bounds = array<i64: 4, 9>}, {pipeline_mode = #tpu.pipeline_mode<synchronous>, transform_indices = @transform_2, window_bounds = array<i64: 8, 4>}, {pipeline_mode = #tpu.pipeline_mode<synchronous>, transform_indices = @transform_3, window_bounds = array<i64: 8, 1>}, {transform_indices = @transform_4, window_bounds = array<i64: 2, 8, 256>}]} {
    %cst = arith.constant 0.000000e+00 : f32
    %0 = vector.broadcast %cst : f32 to vector<2x4x128xf32>
    %c0 = arith.constant 0 : index
    %c0_0 = arith.constant 0 : index
    %c0_1 = arith.constant 0 : index
    %1 = vector.load %arg6[%c0, %c0_0, %c0_1] : memref<2x4x401xf32, #tpu.memory_space<vmem>>, vector<2x4x128xf32>
    tpu.vector_store %arg6[%c0, %c0_0, %c0_1], %0 {strides = array<i32>} : memref<2x4x401xf32, #tpu.memory_space<vmem>>, vector<2x4x128xf32>,
    %cst_2 = arith.constant 0.000000e+00 : f32
    %2 = vector.broadcast %cst_2 : f32 to vector<2x4x17xf32>
    %c0_3 = arith.constant 0 : index
    %c0_4 = arith.constant 0 : index
    %c384 = arith.constant 384 : index
    %3 = vector.load %arg6[%c0_3, %c0_4, %c384] : memref<2x4x401xf32, #tpu.memory_space<vmem>>, vector<2x4x17xf32>
    tpu.vector_store %arg6[%c0_3, %c0_4, %c384], %2 {strides = array<i32>} : memref<2x4x401xf32, #tpu.memory_space<vmem>>, vector<2x4x17xf32>,
    %c0_5 = arith.constant 0 : index
    %c0_6 = arith.constant 0 : index
    %c0_7 = arith.constant 0 : index
    %4 = vector.load %arg1[%c0_5, %c0_6, %c0_7] : memref<2x4x256xf32, #tpu.memory_space<vmem>>, vector<2x4x256xf32>
    %c0_8 = arith.constant 0 : index
    %c0_9 = arith.constant 0 : index
    %c128 = arith.constant 128 : index
    %5 = vector.load %arg6[%c0_8, %c0_9, %c128] : memref<2x4x401xf32, #tpu.memory_space<vmem>>, vector<2x4x256xf32>
    tpu.vector_store %arg6[%c0_8, %c0_9, %c128], %4 {strides = array<i32>} : memref<2x4x401xf32, #tpu.memory_space<vmem>>, vector<2x4x256xf32>,
    %c0_10 = arith.constant 0 : index
    %c0_11 = arith.constant 0 : index
    %6 = vector.load %arg2[%c0_10, %c0_11] : memref<4x9xf32, #tpu.memory_space<vmem>>, vector<4x9xf32>
    %7 = tpu.iota {dimensions = array<i32: 1>} : vector<1x256xi32>
    %c16_i32 = arith.constant 16 : i32
    %c0_i32 = arith.constant 0 : i32
    %8 = arith.cmpi eq, %c16_i32, %c0_i32 : i32
    %c1_i32 = arith.constant 1 : i32
    %9 = arith.select %8, %c1_i32, %c16_i32 : i32
    %10 = vector.broadcast %9 : i32 to vector<1x256xi32>
    %11 = arith.remsi %7, %10 : vector<1x256xi32>
    %c0_i32_12 = arith.constant 0 : i32
    %12 = vector.broadcast %c0_i32_12 : i32 to vector<1x256xi32>
    %13 = arith.cmpi ne, %11, %12 : vector<1x256xi32>
    %c0_i32_13 = arith.constant 0 : i32
    %14 = vector.broadcast %c0_i32_13 : i32 to vector<1x256xi32>
    %15 = arith.cmpi slt, %11, %14 : vector<1x256xi32>
    %c0_i32_14 = arith.constant 0 : i32
    %16 = arith.cmpi slt, %9, %c0_i32_14 : i32
    %17 = vector.broadcast %16 : i1 to vector<1x256xi1>
    %18 = vector.broadcast %17 : vector<1x256xi1> to vector<1x256xi1>
    %19 = arith.xori %15, %18 : vector<1x256xi1>
    %20 = arith.andi %19, %13 : vector<1x256xi1>
    %21 = vector.broadcast %9 : i32 to vector<1x256xi32>
    %22 = arith.addi %11, %21 : vector<1x256xi32>
    %23 = arith.select %20, %22, %11 : vector<1x256xi1>, vector<1x256xi32>
    %c1_i32_15 = arith.constant 1 : i32
    %24 = vector.broadcast %c1_i32_15 : i32 to vector<1x256xi32>
    %25 = arith.cmpi sge, %23, %24 : vector<1x256xi32>
    %26 = arith.extui %25 : vector<1x256xi1> to vector<1x256xi32>
    %27 = arith.sitofp %26 : vector<1x256xi32> to vector<1x256xf32>
    %c14_i32 = arith.constant 14 : i32
    %28 = vector.broadcast %c14_i32 : i32 to vector<1x256xi32>
    %29 = arith.cmpi sle, %23, %28 : vector<1x256xi32>
    %30 = arith.extui %29 : vector<1x256xi1> to vector<1x256xi32>
    %31 = arith.sitofp %30 : vector<1x256xi32> to vector<1x256xf32>
    %cst_16 = arith.constant 0.000000e+00 : f32
    %32 = vector.broadcast %cst_16 : f32 to vector<4x256xf32>
    %cst_17 = arith.constant 0.000000e+00 : f32
    %33 = vector.broadcast %cst_17 : f32 to vector<4x256xf32>
    %c0_18 = arith.constant 0 : index
    %c0_19 = arith.constant 0 : index
    %c111 = arith.constant 111 : index
    %34 = vector.load %arg6[%c0_18, %c0_19, %c111] : memref<2x4x401xf32, #tpu.memory_space<vmem>>, vector<1x4x256xf32>
    %35 = vector.shape_cast %34 : vector<1x4x256xf32> to vector<4x256xf32>
    %36 = vector.extract_strided_slice %6 {offsets = [0, 0], sizes = [4, 1], strides = [1, 1]} : vector<4x9xf32> to vector<4x1xf32>
    %37 = vector.broadcast %36 : vector<4x1xf32> to vector<4x256xf32>
    %38 = arith.mulf %35, %37 : vector<4x256xf32>
    %39 = arith.addf %33, %38 : vector<4x256xf32>
    %c0_20 = arith.constant 0 : index
    %c0_21 = arith.constant 0 : index
    %c127 = arith.constant 127 : index
    %40 = vector.load %arg6[%c0_20, %c0_21, %c127] : memref<2x4x401xf32, #tpu.memory_space<vmem>>, vector<1x4x256xf32>
    %41 = vector.shape_cast %40 : vector<1x4x256xf32> to vector<4x256xf32>
    %42 = vector.extract_strided_slice %6 {offsets = [0, 3], sizes = [4, 1], strides = [1, 1]} : vector<4x9xf32> to vector<4x1xf32>
    %43 = vector.broadcast %42 : vector<4x1xf32> to vector<4x256xf32>
    %44 = arith.mulf %41, %43 : vector<4x256xf32>
    %45 = arith.addf %39, %44 : vector<4x256xf32>
    %c0_22 = arith.constant 0 : index
    %c0_23 = arith.constant 0 : index
    %c143 = arith.constant 143 : index
    %46 = vector.load %arg6[%c0_22, %c0_23, %c143] : memref<2x4x401xf32, #tpu.memory_space<vmem>>, vector<1x4x256xf32>
    %47 = vector.shape_cast %46 : vector<1x4x256xf32> to vector<4x256xf32>
    %48 = vector.extract_strided_slice %6 {offsets = [0, 6], sizes = [4, 1], strides = [1, 1]} : vector<4x9xf32> to vector<4x1xf32>
    %49 = vector.broadcast %48 : vector<4x1xf32> to vector<4x256xf32>
    %50 = arith.mulf %47, %49 : vector<4x256xf32>
    %51 = arith.addf %45, %50 : vector<4x256xf32>
    %52 = vector.broadcast %27 : vector<1x256xf32> to vector<4x256xf32>
    %53 = arith.mulf %51, %52 : vector<4x256xf32>
    %54 = arith.addf %32, %53 : vector<4x256xf32>
    %cst_24 = arith.constant 0.000000e+00 : f32
    %55 = vector.broadcast %cst_24 : f32 to vector<4x256xf32>
    %c0_25 = arith.constant 0 : index
    %c0_26 = arith.constant 0 : index
    %c112 = arith.constant 112 : index
    %56 = vector.load %arg6[%c0_25, %c0_26, %c112] : memref<2x4x401xf32, #tpu.memory_space<vmem>>, vector<1x4x256xf32>
    %57 = vector.shape_cast %56 : vector<1x4x256xf32> to vector<4x256xf32>
    %58 = vector.extract_strided_slice %6 {offsets = [0, 1], sizes = [4, 1], strides = [1, 1]} : vector<4x9xf32> to vector<4x1xf32>
    %59 = vector.broadcast %58 : vector<4x1xf32> to vector<4x256xf32>
    %60 = arith.mulf %57, %59 : vector<4x256xf32>
    %61 = arith.addf %55, %60 : vector<4x256xf32>
    %c0_27 = arith.constant 0 : index
    %c0_28 = arith.constant 0 : index
    %c128_29 = arith.constant 128 : index
    %62 = vector.load %arg6[%c0_27, %c0_28, %c128_29] : memref<2x4x401xf32, #tpu.memory_space<vmem>>, vector<1x4x256xf32>
    %63 = vector.shape_cast %62 : vector<1x4x256xf32> to vector<4x256xf32>
    %64 = vector.extract_strided_slice %6 {offsets = [0, 4], sizes = [4, 1], strides = [1, 1]} : vector<4x9xf32> to vector<4x1xf32>
    %65 = vector.broadcast %64 : vector<4x1xf32> to vector<4x256xf32>
    %66 = arith.mulf %63, %65 : vector<4x256xf32>
    %67 = arith.addf %61, %66 : vector<4x256xf32>
    %c0_30 = arith.constant 0 : index
    %c0_31 = arith.constant 0 : index
    %c144 = arith.constant 144 : index
    %68 = vector.load %arg6[%c0_30, %c0_31, %c144] : memref<2x4x401xf32, #tpu.memory_space<vmem>>, vector<1x4x256xf32>
    %69 = vector.shape_cast %68 : vector<1x4x256xf32> to vector<4x256xf32>
    %70 = vector.extract_strided_slice %6 {offsets = [0, 7], sizes = [4, 1], strides = [1, 1]} : vector<4x9xf32> to vector<4x1xf32>
    %71 = vector.broadcast %70 : vector<4x1xf32> to vector<4x256xf32>
    %72 = arith.mulf %69, %71 : vector<4x256xf32>
    %73 = arith.addf %67, %72 : vector<4x256xf32>
    %74 = arith.addf %54, %73 : vector<4x256xf32>
    %cst_32 = arith.constant 0.000000e+00 : f32
    %75 = vector.broadcast %cst_32 : f32 to vector<4x256xf32>
    %c0_33 = arith.constant 0 : index
    %c0_34 = arith.constant 0 : index
    %c113 = arith.constant 113 : index
    %76 = vector.load %arg6[%c0_33, %c0_34, %c113] : memref<2x4x401xf32, #tpu.memory_space<vmem>>, vector<1x4x256xf32>
    %77 = vector.shape_cast %76 : vector<1x4x256xf32> to vector<4x256xf32>
    %78 = vector.extract_strided_slice %6 {offsets = [0, 2], sizes = [4, 1], strides = [1, 1]} : vector<4x9xf32> to vector<4x1xf32>
    %79 = vector.broadcast %78 : vector<4x1xf32> to vector<4x256xf32>
    %80 = arith.mulf %77, %79 : vector<4x256xf32>
    %81 = arith.addf %75, %80 : vector<4x256xf32>
    %c0_35 = arith.constant 0 : index
    %c0_36 = arith.constant 0 : index
    %c129 = arith.constant 129 : index
    %82 = vector.load %arg6[%c0_35, %c0_36, %c129] : memref<2x4x401xf32, #tpu.memory_space<vmem>>, vector<1x4x256xf32>
    %83 = vector.shape_cast %82 : vector<1x4x256xf32> to vector<4x256xf32>
    %84 = vector.extract_strided_slice %6 {offsets = [0, 5], sizes = [4, 1], strides = [1, 1]} : vector<4x9xf32> to vector<4x1xf32>
    %85 = vector.broadcast %84 : vector<4x1xf32> to vector<4x256xf32>
    %86 = arith.mulf %83, %85 : vector<4x256xf32>
    %87 = arith.addf %81, %86 : vector<4x256xf32>
    %c0_37 = arith.constant 0 : index
    %c0_38 = arith.constant 0 : index
    %c145 = arith.constant 145 : index
    %88 = vector.load %arg6[%c0_37, %c0_38, %c145] : memref<2x4x401xf32, #tpu.memory_space<vmem>>, vector<1x4x256xf32>
    %89 = vector.shape_cast %88 : vector<1x4x256xf32> to vector<4x256xf32>
    %90 = vector.extract_strided_slice %6 {offsets = [0, 8], sizes = [4, 1], strides = [1, 1]} : vector<4x9xf32> to vector<4x1xf32>
    %91 = vector.broadcast %90 : vector<4x1xf32> to vector<4x256xf32>
    %92 = arith.mulf %89, %91 : vector<4x256xf32>
    %93 = arith.addf %87, %92 : vector<4x256xf32>
    %94 = vector.broadcast %31 : vector<1x256xf32> to vector<4x256xf32>
    %95 = arith.mulf %93, %94 : vector<4x256xf32>
    %96 = arith.addf %74, %95 : vector<4x256xf32>
    %cst_39 = arith.constant 0.000000e+00 : f32
    %97 = vector.broadcast %cst_39 : f32 to vector<4x256xf32>
    %cst_40 = arith.constant 0.000000e+00 : f32
    %98 = vector.broadcast %cst_40 : f32 to vector<4x256xf32>
    %c1 = arith.constant 1 : index
    %c0_41 = arith.constant 0 : index
    %c111_42 = arith.constant 111 : index
    %99 = vector.load %arg6[%c1, %c0_41, %c111_42] : memref<2x4x401xf32, #tpu.memory_space<vmem>>, vector<1x4x256xf32>
    %100 = vector.shape_cast %99 : vector<1x4x256xf32> to vector<4x256xf32>
    %101 = vector.extract_strided_slice %6 {offsets = [0, 0], sizes = [4, 1], strides = [1, 1]} : vector<4x9xf32> to vector<4x1xf32>
    %102 = vector.broadcast %101 : vector<4x1xf32> to vector<4x256xf32>
    %103 = arith.mulf %100, %102 : vector<4x256xf32>
    %104 = arith.addf %98, %103 : vector<4x256xf32>
    %c1_43 = arith.constant 1 : index
    %c0_44 = arith.constant 0 : index
    %c127_45 = arith.constant 127 : index
    %105 = vector.load %arg6[%c1_43, %c0_44, %c127_45] : memref<2x4x401xf32, #tpu.memory_space<vmem>>, vector<1x4x256xf32>
    %106 = vector.shape_cast %105 : vector<1x4x256xf32> to vector<4x256xf32>
    %107 = vector.extract_strided_slice %6 {offsets = [0, 3], sizes = [4, 1], strides = [1, 1]} : vector<4x9xf32> to vector<4x1xf32>
    %108 = vector.broadcast %107 : vector<4x1xf32> to vector<4x256xf32>
    %109 = arith.mulf %106, %108 : vector<4x256xf32>
    %110 = arith.addf %104, %109 : vector<4x256xf32>
    %c1_46 = arith.constant 1 : index
    %c0_47 = arith.constant 0 : index
    %c143_48 = arith.constant 143 : index
    %111 = vector.load %arg6[%c1_46, %c0_47, %c143_48] : memref<2x4x401xf32, #tpu.memory_space<vmem>>, vector<1x4x256xf32>
    %112 = vector.shape_cast %111 : vector<1x4x256xf32> to vector<4x256xf32>
    %113 = vector.extract_strided_slice %6 {offsets = [0, 6], sizes = [4, 1], strides = [1, 1]} : vector<4x9xf32> to vector<4x1xf32>
    %114 = vector.broadcast %113 : vector<4x1xf32> to vector<4x256xf32>
    %115 = arith.mulf %112, %114 : vector<4x256xf32>
    %116 = arith.addf %110, %115 : vector<4x256xf32>
    %117 = vector.broadcast %27 : vector<1x256xf32> to vector<4x256xf32>
    %118 = arith.mulf %116, %117 : vector<4x256xf32>
    %119 = arith.addf %97, %118 : vector<4x256xf32>
    %cst_49 = arith.constant 0.000000e+00 : f32
    %120 = vector.broadcast %cst_49 : f32 to vector<4x256xf32>
    %c1_50 = arith.constant 1 : index
    %c0_51 = arith.constant 0 : index
    %c112_52 = arith.constant 112 : index
    %121 = vector.load %arg6[%c1_50, %c0_51, %c112_52] : memref<2x4x401xf32, #tpu.memory_space<vmem>>, vector<1x4x256xf32>
    %122 = vector.shape_cast %121 : vector<1x4x256xf32> to vector<4x256xf32>
    %123 = vector.extract_strided_slice %6 {offsets = [0, 1], sizes = [4, 1], strides = [1, 1]} : vector<4x9xf32> to vector<4x1xf32>
    %124 = vector.broadcast %123 : vector<4x1xf32> to vector<4x256xf32>
    %125 = arith.mulf %122, %124 : vector<4x256xf32>
    %126 = arith.addf %120, %125 : vector<4x256xf32>
    %c1_53 = arith.constant 1 : index
    %c0_54 = arith.constant 0 : index
    %c128_55 = arith.constant 128 : index
    %127 = vector.load %arg6[%c1_53, %c0_54, %c128_55] : memref<2x4x401xf32, #tpu.memory_space<vmem>>, vector<1x4x256xf32>
    %128 = vector.shape_cast %127 : vector<1x4x256xf32> to vector<4x256xf32>
    %129 = vector.extract_strided_slice %6 {offsets = [0, 4], sizes = [4, 1], strides = [1, 1]} : vector<4x9xf32> to vector<4x1xf32>
    %130 = vector.broadcast %129 : vector<4x1xf32> to vector<4x256xf32>
    %131 = arith.mulf %128, %130 : vector<4x256xf32>
    %132 = arith.addf %126, %131 : vector<4x256xf32>
    %c1_56 = arith.constant 1 : index
    %c0_57 = arith.constant 0 : index
    %c144_58 = arith.constant 144 : index
    %133 = vector.load %arg6[%c1_56, %c0_57, %c144_58] : memref<2x4x401xf32, #tpu.memory_space<vmem>>, vector<1x4x256xf32>
    %134 = vector.shape_cast %133 : vector<1x4x256xf32> to vector<4x256xf32>
    %135 = vector.extract_strided_slice %6 {offsets = [0, 7], sizes = [4, 1], strides = [1, 1]} : vector<4x9xf32> to vector<4x1xf32>
    %136 = vector.broadcast %135 : vector<4x1xf32> to vector<4x256xf32>
    %137 = arith.mulf %134, %136 : vector<4x256xf32>
    %138 = arith.addf %132, %137 : vector<4x256xf32>
    %139 = arith.addf %119, %138 : vector<4x256xf32>
    %cst_59 = arith.constant 0.000000e+00 : f32
    %140 = vector.broadcast %cst_59 : f32 to vector<4x256xf32>
    %c1_60 = arith.constant 1 : index
    %c0_61 = arith.constant 0 : index
    %c113_62 = arith.constant 113 : index
    %141 = vector.load %arg6[%c1_60, %c0_61, %c113_62] : memref<2x4x401xf32, #tpu.memory_space<vmem>>, vector<1x4x256xf32>
    %142 = vector.shape_cast %141 : vector<1x4x256xf32> to vector<4x256xf32>
    %143 = vector.extract_strided_slice %6 {offsets = [0, 2], sizes = [4, 1], strides = [1, 1]} : vector<4x9xf32> to vector<4x1xf32>
    %144 = vector.broadcast %143 : vector<4x1xf32> to vector<4x256xf32>
    %145 = arith.mulf %142, %144 : vector<4x256xf32>
    %146 = arith.addf %140, %145 : vector<4x256xf32>
    %c1_63 = arith.constant 1 : index
    %c0_64 = arith.constant 0 : index
    %c129_65 = arith.constant 129 : index
    %147 = vector.load %arg6[%c1_63, %c0_64, %c129_65] : memref<2x4x401xf32, #tpu.memory_space<vmem>>, vector<1x4x256xf32>
    %148 = vector.shape_cast %147 : vector<1x4x256xf32> to vector<4x256xf32>
    %149 = vector.extract_strided_slice %6 {offsets = [0, 5], sizes = [4, 1], strides = [1, 1]} : vector<4x9xf32> to vector<4x1xf32>
    %150 = vector.broadcast %149 : vector<4x1xf32> to vector<4x256xf32>
    %151 = arith.mulf %148, %150 : vector<4x256xf32>
    %152 = arith.addf %146, %151 : vector<4x256xf32>
    %c1_66 = arith.constant 1 : index
    %c0_67 = arith.constant 0 : index
    %c145_68 = arith.constant 145 : index
    %153 = vector.load %arg6[%c1_66, %c0_67, %c145_68] : memref<2x4x401xf32, #tpu.memory_space<vmem>>, vector<1x4x256xf32>
    %154 = vector.shape_cast %153 : vector<1x4x256xf32> to vector<4x256xf32>
    %155 = vector.extract_strided_slice %6 {offsets = [0, 8], sizes = [4, 1], strides = [1, 1]} : vector<4x9xf32> to vector<4x1xf32>
    %156 = vector.broadcast %155 : vector<4x1xf32> to vector<4x256xf32>
    %157 = arith.mulf %154, %156 : vector<4x256xf32>
    %158 = arith.addf %152, %157 : vector<4x256xf32>
    %159 = vector.broadcast %31 : vector<1x256xf32> to vector<4x256xf32>
    %160 = arith.mulf %158, %159 : vector<4x256xf32>
    %161 = arith.addf %139, %160 : vector<4x256xf32>
    %162 = tpu.concatenate %96, %161 in 1 : vector<4x256xf32>, vector<4x256xf32> -> vector<4x512xf32>
    %c0_69 = arith.constant 0 : index
    %c0_70 = arith.constant 0 : index
    %163 = vector.load %arg3[%c0_69, %c0_70] : memref<8x4xbf16, #tpu.memory_space<vmem>>, vector<8x4xbf16>
    %164 = arith.truncf %162 : vector<4x512xf32> to vector<4x512xbf16>
    %cst_71 = arith.constant dense<0.000000e+00> : vector<8x512xf32>
    %165 = tpu.matmul %163, %164, %cst_71 {dimension_numbers = #tpu.dot_dimension_numbers<[1], [0], [0], [1], [0, 0, 1, 1], [], []>} : vector<8x4xbf16>, vector<4x512xbf16>, vector<8x512xf32> -> vector<8x512xf32>
    %c0_72 = arith.constant 0 : index
    %c0_73 = arith.constant 0 : index
    %166 = vector.load %arg4[%c0_72, %c0_73] : memref<8x1xf32, #tpu.memory_space<vmem>>, vector<8x1xf32>
    %167 = vector.broadcast %166 : vector<8x1xf32> to vector<8x512xf32>
    %168 = arith.addf %165, %167 : vector<8x512xf32>
    %cst_74 = arith.constant 0.000000e+00 : f32
    %169 = vector.broadcast %cst_74 : f32 to vector<8x512xf32>
    %170 = arith.maximumf %168, %169 : vector<8x512xf32>
    %171 = vector.extract_strided_slice %170 {offsets = [0, 0], sizes = [8, 256], strides = [1, 1]} : vector<8x512xf32> to vector<8x256xf32>
    %c0_75 = arith.constant 0 : index
    %c0_76 = arith.constant 0 : index
    %c0_77 = arith.constant 0 : index
    %172 = vector.load %arg5[%c0_75, %c0_76, %c0_77] : memref<2x8x256xf32, #tpu.memory_space<vmem>>, vector<1x8x256xf32>
    %173 = vector.shape_cast %172 : vector<1x8x256xf32> to vector<8x256xf32>
    %174 = vector.shape_cast %171 : vector<8x256xf32> to vector<1x8x256xf32>
    tpu.vector_store %arg5[%c0_75, %c0_76, %c0_77], %174 {strides = array<i32>} : memref<2x8x256xf32, #tpu.memory_space<vmem>>, vector<1x8x256xf32>,
    %175 = vector.extract_strided_slice %170 {offsets = [0, 256], sizes = [8, 256], strides = [1, 1]} : vector<8x512xf32> to vector<8x256xf32>
    %c1_78 = arith.constant 1 : index
    %c0_79 = arith.constant 0 : index
    %c0_80 = arith.constant 0 : index
    %176 = vector.load %arg5[%c1_78, %c0_79, %c0_80] : memref<2x8x256xf32, #tpu.memory_space<vmem>>, vector<1x8x256xf32>
    %177 = vector.shape_cast %176 : vector<1x8x256xf32> to vector<8x256xf32>
    %178 = vector.shape_cast %175 : vector<8x256xf32> to vector<1x8x256xf32>
    tpu.vector_store %arg5[%c1_78, %c0_79, %c0_80], %178 {strides = array<i32>} : memref<2x8x256xf32, #tpu.memory_space<vmem>>, vector<1x8x256xf32>,
    return
  }
  func.func @transform_0(%arg0: i32) -> (i32, i32, i32) {
    %c0_i32 = arith.constant 0 : i32
    %c0_i32_0 = arith.constant 0 : i32
    %c0_i32_1 = arith.constant 0 : i32
    return %arg0, %c0_i32, %c0_i32_0 : i32, i32, i32
  }
  func.func @transform_1(%arg0: i32) -> (i32, i32) {
    %c0_i32 = arith.constant 0 : i32
    %c0_i32_0 = arith.constant 0 : i32
    %c0_i32_1 = arith.constant 0 : i32
    return %c0_i32, %c0_i32_0 : i32, i32
  }
  func.func @transform_2(%arg0: i32) -> (i32, i32) {
    %c0_i32 = arith.constant 0 : i32
    %c0_i32_0 = arith.constant 0 : i32
    %c0_i32_1 = arith.constant 0 : i32
    return %c0_i32, %c0_i32_0 : i32, i32
  }
  func.func @transform_3(%arg0: i32) -> (i32, i32) {
    %c0_i32 = arith.constant 0 : i32
    %c0_i32_0 = arith.constant 0 : i32
    %c0_i32_1 = arith.constant 0 : i32
    return %c0_i32, %c0_i32_0 : i32, i32
  }
  func.func @transform_4(%arg0: i32) -> (i32, i32, i32) {
    %c0_i32 = arith.constant 0 : i32
    %c0_i32_0 = arith.constant 0 : i32
    %c0_i32_1 = arith.constant 0 : i32
    return %arg0, %c0_i32, %c0_i32_0 : i32, i32, i32
  }
}

</mosaic_0001>

<llo_original>
// kernel: tpu_custom_call.1
$region0: #{tpu_custom_call.1}
  #allocation0 [shape = 'u32[]', space=smem, size = 0x4, offset = 0x4, fixed_abs, tag = 'smem constant byte address 0x4 - core index']
  #allocation1 [shape = 'u32[72,128]{1,0:T(1,128)}', space=vmem, size = 0x9000, scoped, tag = 'internal scratch']
  #allocation2 [shape = 'f32[2,4,401]{2,1,0:T(4,128)}', space=vmem, size = 0x4000, scoped, tag = 'scratch operand']
  %s0 = inlined_call_operand.hbm [shape: f32[4,4,256], index: 0, kind: input, shape index: {}]
  %s1 = inlined_call_operand.vmem [shape: f32[4,9], index: 1, kind: input, shape index: {}]
  %s2 = inlined_call_operand.vmem [shape: bf16[8,4], index: 2, kind: input, shape index: {}]
  %s3 = inlined_call_operand.vmem [shape: f32[8,1], index: 3, kind: input, shape index: {}]
  %s4 = inlined_call_operand.hbm [shape: f32[4,8,256], index: 4, kind: output, shape index: {}]
  %s5 = sld [smem:[#allocation0]]
  $region53: #{tpu_custom_call.1} parent=0
    _
  %s7 = ssub.s32 1, %s5
  %s8 = scalar_select 0, %s7, %s5
  $region1: #{tpu_custom_call.1} parent=0
    #allocation3 [shape = 'u8[16384]{0}', space=vmem, size = 0x4000, scoped, tag = 'input window, operand 0']
    #allocation4 [shape = 's32[2]{0}', space=sflag, size = 0x8, scoped, tag = 'scoped memory for tpu_custom_call.1']
    #allocation5 [shape = 's32[2]{0}', space=sflag, size = 0x8, scoped, tag = 'scoped memory for tpu_custom_call.1']
    #allocation6 [shape = 'u8[32768]{0}', space=vmem, size = 0x8000, scoped, tag = 'output window, operand 0']
    %9 = vsyncpa [#allocation4], 0
    %s10 = scalar_lea.sflag [#allocation4], 1
    %11 = vsyncpa %s10, 0
    %12 = vsyncpa [#allocation5], 0
    %s13 = scalar_lea.sflag [#allocation5], 1
    %14 = vsyncpa %s13, 0
    loop: start=0, step=1, limit=4
    $region2: #{tpu_custom_call.1} parent=1 // loop_pre_header
      _
    $region3: #{tpu_custom_call.1} parent=1 // loop_header
      %s16 = sphi 0, %s20
      %p17 = scmp.ge.s32.totalorder %s16, 4
      %s26 = sphi 0, %s28
      %s29 = sphi 0, %s26
      %s30 = sphi 0, %s29
      %s46 = sphi 0, %s30
      %s50 = sphi 0, %s50
      %s52 = sphi 0, %s50
      %s53 = sphi 0, %s52
      %s67 = sphi 0, %s53
      %s71 = sphi 0, %s71
      %s73 = sphi 0, %s71
      %s74 = sphi 0, %s73
      %s88 = sphi 0, %s74
      %s92 = sphi 0, %s92
      %s94 = sphi 0, %s92
      %s95 = sphi 0, %s94
      %s109 = sphi 0, %s95
      %s115 = sphi 0, %s117
      %s118 = sphi 0, %s115
      %s119 = sphi 0, %s118
      %s135 = sphi 0, %s119
    $region4: #{tpu_custom_call.1} parent=1 // loop_header_branch
      %19 = sbr.rel (%p17) target = $region8
    $region5: #{tpu_custom_call.1} parent=1 // loop_body
      %s21 = ssub.s32 %s16, 1
      %s22 = ssub.s32 %s16, 2
      %s23 = sadd.s32 %s16, 1
      %s24 = ssub.s32 %s16, %s23
      %p25 = scmp.eq.s32.totalorder %s24, 0
      %s27 = sadd.s32 %s26, 1
      %s28 = scalar_select %p25, %s26, %s27
      %p31 = pneg %p25
      %p32 = scmp.eq.s32.totalorder %s16, 1
      %p33 = por %p31, %p32
      %p34 = scmp.ne.s32.totalorder %s26, %s29
      %p35 = scmp.eq.s32.totalorder %s16, 0
      %p36 = por %p34, %p35
      %p37 = scmp.ne.s32.totalorder %s26, %s29
      %p38 = scmp.eq.s32.totalorder %s21, 1
      %p39 = por %p37, %p38
      %p40 = scmp.ne.s32.totalorder %s29, %s30
      %p41 = scmp.eq.s32.totalorder %s21, 0
      %p42 = por %p40, %p41
      %p43 = scmp.ne.s32.totalorder %s29, %s30
      %p44 = scmp.eq.s32.totalorder %s22, 1
      %p45 = por %p43, %p44
      %p47 = scmp.ne.s32.totalorder %s30, %s46
      %p48 = scmp.eq.s32.totalorder %s22, 0
      %p49 = por %p47, %p48
      %s51 = sadd.s32 %s50, 1
      %p54 = scmp.eq.s32.totalorder %s16, 1
      %p55 = scmp.ne.s32.totalorder %s50, %s52
      %p56 = scmp.eq.s32.totalorder %s16, 0
      %p57 = por %p55, %p56
      %p58 = scmp.ne.s32.totalorder %s50, %s52
      %p59 = scmp.eq.s32.totalorder %s21, 1
      %p60 = por %p58, %p59
      %p61 = scmp.ne.s32.totalorder %s52, %s53
      %p62 = scmp.eq.s32.totalorder %s21, 0
      %p63 = por %p61, %p62
      %p64 = scmp.ne.s32.totalorder %s52, %s53
      %p65 = scmp.eq.s32.totalorder %s22, 1
      %p66 = por %p64, %p65
      %p68 = scmp.ne.s32.totalorder %s53, %s67
      %p69 = scmp.eq.s32.totalorder %s22, 0
      %p70 = por %p68, %p69
      %s72 = sadd.s32 %s71, 1
      %p75 = scmp.eq.s32.totalorder %s16, 1
      %p76 = scmp.ne.s32.totalorder %s71, %s73
      %p77 = scmp.eq.s32.totalorder %s16, 0
      %p78 = por %p76, %p77
      %p79 = scmp.ne.s32.totalorder %s71, %s73
      %p80 = scmp.eq.s32.totalorder %s21, 1
      %p81 = por %p79, %p80
      %p82 = scmp.ne.s32.totalorder %s73, %s74
      %p83 = scmp.eq.s32.totalorder %s21, 0
      %p84 = por %p82, %p83
      %p85 = scmp.ne.s32.totalorder %s73, %s74
      %p86 = scmp.eq.s32.totalorder %s22, 1
      %p87 = por %p85, %p86
      %p89 = scmp.ne.s32.totalorder %s74, %s88
      %p90 = scmp.eq.s32.totalorder %s22, 0
      %p91 = por %p89, %p90
      %s93 = sadd.s32 %s92, 1
      %p96 = scmp.eq.s32.totalorder %s16, 1
      %p97 = scmp.ne.s32.totalorder %s92, %s94
      %p98 = scmp.eq.s32.totalorder %s16, 0
      %p99 = por %p97, %p98
      %p100 = scmp.ne.s32.totalorder %s92, %s94
      %p101 = scmp.eq.s32.totalorder %s21, 1
      %p102 = por %p100, %p101
      %p103 = scmp.ne.s32.totalorder %s94, %s95
      %p104 = scmp.eq.s32.totalorder %s21, 0
      %p105 = por %p103, %p104
      %p106 = scmp.ne.s32.totalorder %s94, %s95
      %p107 = scmp.eq.s32.totalorder %s22, 1
      %p108 = por %p106, %p107
      %p110 = scmp.ne.s32.totalorder %s95, %s109
      %p111 = scmp.eq.s32.totalorder %s22, 0
      %p112 = por %p110, %p111
      %s113 = ssub.s32 %s16, %s23
      %p114 = scmp.eq.s32.totalorder %s113, 0
      %s116 = sadd.s32 %s115, 1
      %s117 = scalar_select %p114, %s115, %s116
      %p120 = pneg %p114
      %p121 = scmp.eq.s32.totalorder %s16, 1
      %p122 = por %p120, %p121
      %p123 = scmp.ne.s32.totalorder %s115, %s118
      %p124 = scmp.eq.s32.totalorder %s16, 0
      %p125 = por %p123, %p124
      %p126 = scmp.ne.s32.totalorder %s115, %s118
      %p127 = scmp.eq.s32.totalorder %s21, 1
      %p128 = por %p126, %p127
      %p129 = scmp.ne.s32.totalorder %s118, %s119
      %p130 = scmp.eq.s32.totalorder %s21, 0
      %p131 = por %p129, %p130
      %p132 = scmp.ne.s32.totalorder %s118, %s119
      %p133 = scmp.eq.s32.totalorder %s22, 1
      %p134 = por %p132, %p133
      %p136 = scmp.ne.s32.totalorder %s119, %s135
      %p137 = scmp.eq.s32.totalorder %s22, 0
      %p138 = por %p136, %p137
      %p139 = scmp.le.s32.totalorder 1, %s16
      %p140 = scmp.lt.s32.totalorder %s16, 3
      %p141 = pnand %p139, %p140
      %p142 = pneg %p141
      // Predicated region
      $region9: #{tpu_custom_call.1} parent=5 // pred_check
        _
      $region10: #{tpu_custom_call.1} parent=5 // pred_check_branch
        %144 = sbr.rel (%p141) target = $region12
      $region11: #{tpu_custom_call.1} parent=5 // pred_region
        %s145 = ssub.s32 %s16, 1
        // Predicated region
        $region13: #{tpu_custom_call.1} parent=11 // pred_check
          %p146 = pneg %p63
        $region14: #{tpu_custom_call.1} parent=11 // pred_check_branch
          %148 = sbr.rel (%p146) target = $region16
        $region15: #{tpu_custom_call.1} parent=11 // pred_region
          _
        $region16: #{tpu_custom_call.1} parent=11 // pred_fallthru
          _
        // Predicated region
        $region17: #{tpu_custom_call.1} parent=11 // pred_check
          %p149 = pneg %p84
        $region18: #{tpu_custom_call.1} parent=11 // pred_check_branch
          %151 = sbr.rel (%p149) target = $region20
        $region19: #{tpu_custom_call.1} parent=11 // pred_region
          _
        $region20: #{tpu_custom_call.1} parent=11 // pred_fallthru
          _
        // Predicated region
        $region21: #{tpu_custom_call.1} parent=11 // pred_check
          %p152 = pneg %p105
        $region22: #{tpu_custom_call.1} parent=11 // pred_check_branch
          %154 = sbr.rel (%p152) target = $region24
        $region23: #{tpu_custom_call.1} parent=11 // pred_region
          _
        $region24: #{tpu_custom_call.1} parent=11 // pred_fallthru
          _
      $region12: #{tpu_custom_call.1} parent=5 // pred_fallthru
        _
      %p155 = scmp.lt.s32.totalorder %s16, 2
      // Predicated region
      $region25: #{tpu_custom_call.1} parent=5 // pred_check
        %p156 = pneg %p155
      $region26: #{tpu_custom_call.1} parent=5 // pred_check_branch
        %158 = sbr.rel (%p156) target = $region28
      $region27: #{tpu_custom_call.1} parent=5 // pred_region
        // Predicated region
        $region29: #{tpu_custom_call.1} parent=27 // pred_check
          %p159 = pneg %p36
        $region30: #{tpu_custom_call.1} parent=27 // pred_check_branch
          %161 = sbr.rel (%p159) target = $region32
        $region31: #{tpu_custom_call.1} parent=27 // pred_region
          %s162 = sand.u32 %s26, 1
          %s163 = scalar_lea.sflag [#allocation4], %s162
          %s164 = sand.u32 %s26, 1
          %s165 = smul.addr %s164, 16
          %s166 = scalar_lea.vmem [#allocation3], %s165
          %s167 = smul.u32 2, %s16
          %169 = vsyncadd %s163, 0
          %s170 = smul.addr %s167, 2
          %s171 = smul.addr %s170, 4
          %s172 = scalar_lea.hbm %s0, %s171
          %s173 = sshll.u32 %s172, 4
          %s174 = int_to_ptr.hbm [resolvable:$true] %s173
          %s175 = sshll.u32 %s166, 4
          %s176 = int_to_ptr.vmem [resolvable:$true] %s175
          %181 = dma.hbm_to_vmem [thread:$0]  %s174, 256, %s176, %s163, 128, 128, 8
        $region32: #{tpu_custom_call.1} parent=27 // pred_fallthru
          _
      $region28: #{tpu_custom_call.1} parent=5 // pred_fallthru
        _
      %p182 = scmp.le.s32.totalorder 1, %s16
      %p183 = scmp.lt.s32.totalorder %s16, 3
      %p184 = pnand %p182, %p183
      %p185 = pneg %p184
      // Predicated region
      $region33: #{tpu_custom_call.1} parent=5 // pred_check
        _
      $region34: #{tpu_custom_call.1} parent=5 // pred_check_branch
        %187 = sbr.rel (%p184) target = $region36
      $region35: #{tpu_custom_call.1} parent=5 // pred_region
        %s188 = ssub.s32 %s16, 1
        %s189 = sand.u32 %s29, 1
        %s190 = scalar_lea.sflag [#allocation4], %s189
        %s191 = sand.u32 %s29, 1
        %s192 = smul.addr %s191, 16
        %s193 = scalar_lea.vmem [#allocation3], %s192
        // Predicated region
        $region37: #{tpu_custom_call.1} parent=35 // pred_check
          %p194 = pneg %p42
        $region38: #{tpu_custom_call.1} parent=35 // pred_check_branch
          %196 = sbr.rel (%p194) target = $region40
        $region39: #{tpu_custom_call.1} parent=35 // pred_region
          %198 = dma.done %s190, 256
        $region40: #{tpu_custom_call.1} parent=35 // pred_fallthru
          _
        %s199 = sand.u32 %s29, 1
        %s200 = scalar_lea.sflag [#allocation4], %s199
        %s201 = sand.u32 %s29, 1
        %s202 = smul.addr %s201, 16
        %s203 = scalar_lea.vmem [#allocation3], %s202
        %p204 = pneg %p42
        %p205 = pneg %p39
        %p206 = pneg %p63
        %p207 = pneg %p60
        %p208 = pneg %p84
        %p209 = pneg %p81
        %p210 = pneg %p105
        %p211 = pneg %p102
        %p212 = pneg %p131
        %p213 = pneg %p128
        %s214 = sand.u32 %s118, 1
        %s215 = scalar_lea.sflag [#allocation5], %s214
        %s216 = sand.u32 %s118, 1
        %s217 = smul.addr %s216, 32
        %s218 = scalar_lea.vmem [#allocation6], %s217
        %s219 = smul.u32 2, %s21
        %s220 = smul.u32 2, %s21
        %222 = vst [vmem:[#allocation2] sm:$0xf] 0.0
        %223 = vst [vmem:[#allocation2 + $0x10] sm:$0xf] 0.0
        %vm224 = vcmask 134144
        %225 = vst.msk [vmem:[#allocation2 + $0xc] sm:$0xf] %vm224, 0.0
        %226 = vst.msk [vmem:[#allocation2 + $0x1c] sm:$0xf] %vm224, 0.0
        %v227 = vld [vmem:[%s193] sm:$0xff]
        %v228 = vld [vmem:[%s193 + $0x8] sm:$0xff]
        %229 = vst [vmem:[#allocation2 + $0x4] sm:$0xff] %v227
        %230 = vst [vmem:[#allocation2 + $0x14] sm:$0xff] %v228
        %v231 = vld [vmem:[%s1] sm:$0xf]
        %v232 = vlaneseq
        %v233 = vand.u32 %v232, 127
        %v234 = vadd.s32 %v233, 128
        %vm235 = vcmp.lt.s32.totalorder %v233, 0
        %v236 = vsub.s32 0, %v233
        %v237 = vsel %vm235, %v236, %v233
        %v238 = vshrl.u32 %v237, 4
        %v239 = vand.u32 %v237, 15
        %v240 = vsub.s32 0, %v239
        %v241 = vsel %vm235, %v240, %v239
        %vm242 = vcmp.lt.s32.totalorder %v234, 0
        %v243 = vsub.s32 0, %v234
        %v244 = vsel %vm242, %v243, %v234
        %v245 = vshrl.u32 %v244, 4
        %v246 = vand.u32 %v244, 15
        %v247 = vsub.s32 0, %v246
        %v248 = vsel %vm242, %v247, %v246
        %vm249 = vcmp.ne.s32.totalorder %v241, 0
        %vm250 = vcmp.ne.s32.totalorder %v248, 0
        %vm251 = vcmp.lt.s32.totalorder %v241, 0
        %vm252 = vcmp.lt.s32.totalorder %v248, 0
        %vm253 = vmand %vm251, %vm249
        %vm254 = vmand %vm252, %vm250
        %v255 = vadd.s32 %v241, 16
        %v256 = vadd.s32 %v248, 16
        %v257 = vsel %vm253, %v255, %v241
        %v258 = vsel %vm254, %v256, %v248
        %vm259 = vcmp.ge.s32.totalorder %v257, 1
        %vm260 = vcmp.ge.s32.totalorder %v258, 1
        %v261 = vsel %vm259, 1, 0
        %v262 = vsel %vm260, 1, 0
        %v263 = vcvt.s32.f32 %v261
        %v264 = vcvt.s32.f32 %v262
        %vm265 = vcmp.le.s32.totalorder %v257, 14
        %vm266 = vcmp.le.s32.totalorder %v258, 14
        %v267 = vsel %vm265, 1, 0
        %v268 = vsel %vm266, 1, 0
        %v269 = vcvt.s32.f32 %v267
        %v270 = vcvt.s32.f32 %v268
        %v271 = vld [vmem:[#allocation2] sm:$0xff]
        %v272 = vld [vmem:[#allocation2 + $0x8] sm:$0xf]
        %274 = vset.pattern.permute.xlu0 0
        %275 = vperm.xlu0 %274, %v231
        %v276 = vpop.permute.xlu0 %275
        %v278 = vunpack.c.l.s4 839922192
        %v279 = vunpack.c.0.s8 %v278
        %v280 = vperm.slane %v276, %v279
        %v282 = vmul.f32 %v271, %v280
        %v283 = vmul.f32 %v272, %v280
        %v284 = vadd.f32 %v282, 0.0
        %v285 = vadd.f32 %v283, 0.0
        %286 = vset.pattern.permute.xlu0 3
        %287 = vperm.xlu0 %286, %v231
        %v288 = vpop.permute.xlu0 %287
        %v290 = vunpack.c.l.s4 839922192
        %v291 = vunpack.c.0.s8 %v290
        %v292 = vperm.slane %v288, %v291
        %v294 = vmul.f32 %v271, %v292
        %v295 = vmul.f32 %v272, %v292
        %298 = vrot.lane.b32.xlu0 %v294, 112
        %v299 = vpop.permute.xlu0 %298
        %300 = vrot.lane.b32.xlu0 %v295, 112
        %v301 = vpop.permute.xlu0 %300
        %v302 = vrot.slane %v299, 4
        %v303 = vrot.slane %v301, 4
        %vm304 = vcmask 1043456
        %v305 = vsel %vm304, %v302, %v303
        %vm306 = vcmask 916480
        %v307 = vsel %vm306, %v299, %v305
        %v310 = vadd.f32 %v284, %v307
        %v311 = vadd.f32 %v285, %v301
        %v312 = vld [vmem:[#allocation2 + $0x4] sm:$0xff]
        %v313 = vld [vmem:[#allocation2 + $0xc] sm:$0xf]
        %314 = vset.pattern.permute.xlu0 6
        %315 = vperm.xlu0 %314, %v231
        %v316 = vpop.permute.xlu0 %315
        %v318 = vunpack.c.l.s4 839922192
        %v319 = vunpack.c.0.s8 %v318
        %v320 = vperm.slane %v316, %v319
        %v322 = vmul.f32 %v312, %v320
        %v323 = vmul.f32 %v313, %v320
        %326 = vrot.lane.b32.xlu0 %v322, 96
        %v327 = vpop.permute.xlu0 %326
        %328 = vrot.lane.b32.xlu0 %v323, 96
        %v329 = vpop.permute.xlu0 %328
        %v330 = vrot.slane %v327, 4
        %vm331 = vcmask 785408
        %v332 = vsel %vm331, %v330, %v327
        %v333 = vsel %vm331, %v330, %v329
        %v336 = vadd.f32 %v310, %v332
        %v337 = vadd.f32 %v311, %v333
        %v340 = vrot.slane %v264, 4
        %v341 = vsel %vm304, %v263, %v340
        %342 = vrot.lane.b32.xlu0 %v341, 111
        %v343 = vpop.permute.xlu0 %342
        %v344 = vrot.slane %v343, 4
        %vm345 = vcmask 908288
        %v346 = vsel %vm345, %v344, %v343
        %v349 = vmul.f32 %v336, %v346
        %v350 = vmul.f32 %v337, %v344
        %v351 = vadd.f32 %v349, 0.0
        %v352 = vadd.f32 %v350, 0.0
        %353 = vset.pattern.permute.xlu0 1
        %354 = vperm.xlu0 %353, %v231
        %v355 = vpop.permute.xlu0 %354
        %v357 = vunpack.c.l.s4 839922192
        %v358 = vunpack.c.0.s8 %v357
        %v359 = vperm.slane %v355, %v358
        %v361 = vmul.f32 %v271, %v359
        %v362 = vmul.f32 %v272, %v359
        %v363 = vadd.f32 %v361, 0.0
        %v364 = vadd.f32 %v362, 0.0
        %v365 = vld [vmem:[#allocation2 + $0x4] sm:$0xff]
        %366 = vset.pattern.permute.xlu0 4
        %367 = vperm.xlu0 %366, %v231
        %v368 = vpop.permute.xlu0 %367
        %v370 = vunpack.c.l.s4 839922192
        %v371 = vunpack.c.0.s8 %v370
        %v372 = vperm.slane %v368, %v371
        %v374 = vmul.f32 %v365, %v372
        %376 = vrot.lane.b32.xlu0 %v374, 112
        %v377 = vpop.permute.xlu0 %376
        %v378 = vrot.slane %v377, 4
        %v379 = vsel %vm306, %v378, %v377
        %v382 = vadd.f32 %v363, %v379
        %v383 = vadd.f32 %v364, %v378
        %384 = vset.pattern.permute.xlu0 7
        %385 = vperm.xlu0 %384, %v231
        %v386 = vpop.permute.xlu0 %385
        %v388 = vunpack.c.l.s4 839922192
        %v389 = vunpack.c.0.s8 %v388
        %v390 = vperm.slane %v386, %v389
        %v392 = vmul.f32 %v312, %v390
        %v393 = vmul.f32 %v313, %v390
        %396 = vrot.lane.b32.xlu0 %v392, 96
        %v397 = vpop.permute.xlu0 %396
        %398 = vrot.lane.b32.xlu0 %v393, 96
        %v399 = vpop.permute.xlu0 %398
        %v400 = vrot.slane %v397, 4
        %v401 = vsel %vm331, %v400, %v397
        %v402 = vsel %vm331, %v400, %v399
        %v405 = vadd.f32 %v382, %v401
        %v406 = vadd.f32 %v383, %v402
        %409 = vrot.lane.b32.xlu0 %v405, 127
        %v410 = vpop.permute.xlu0 %409
        %411 = vrot.lane.b32.xlu0 %v406, 127
        %v412 = vpop.permute.xlu0 %411
        %v413 = vrot.slane %v410, 4
        %v414 = vrot.slane %v412, 4
        %v415 = vsel %vm304, %v413, %v414
        %vm416 = vcmask 1039360
        %v417 = vsel %vm416, %v410, %v415
        %v420 = vadd.f32 %v351, %v417
        %v421 = vadd.f32 %v352, %v412
        %422 = vset.pattern.permute.xlu0 2
        %423 = vperm.xlu0 %422, %v231
        %v424 = vpop.permute.xlu0 %423
        %v426 = vunpack.c.l.s4 839922192
        %v427 = vunpack.c.0.s8 %v426
        %v428 = vperm.slane %v424, %v427
        %v430 = vmul.f32 %v271, %v428
        %v431 = vmul.f32 %v272, %v428
        %v432 = vadd.f32 %v430, 0.0
        %v433 = vadd.f32 %v431, 0.0
        %434 = vset.pattern.permute.xlu0 5
        %435 = vperm.xlu0 %434, %v231
        %v436 = vpop.permute.xlu0 %435
        %v438 = vunpack.c.l.s4 839922192
        %v439 = vunpack.c.0.s8 %v438
        %v440 = vperm.slane %v436, %v439
        %v442 = vmul.f32 %v312, %v440
        %v443 = vmul.f32 %v313, %v440
        %446 = vrot.lane.b32.xlu0 %v442, 112
        %v447 = vpop.permute.xlu0 %446
        %448 = vrot.lane.b32.xlu0 %v443, 112
        %v449 = vpop.permute.xlu0 %448
        %v450 = vrot.slane %v447, 4
        %v451 = vsel %vm306, %v450, %v447
        %v452 = vsel %vm306, %v450, %v449
        %v455 = vadd.f32 %v432, %v451
        %v456 = vadd.f32 %v433, %v452
        %457 = vset.pattern.permute.xlu0 8
        %458 = vperm.xlu0 %457, %v231
        %v459 = vpop.permute.xlu0 %458
        %v461 = vunpack.c.l.s4 839922192
        %v462 = vunpack.c.0.s8 %v461
        %v463 = vperm.slane %v459, %v462
        %v465 = vmul.f32 %v312, %v463
        %v466 = vmul.f32 %v313, %v463
        %469 = vrot.lane.b32.xlu0 %v465, 96
        %v470 = vpop.permute.xlu0 %469
        %471 = vrot.lane.b32.xlu0 %v466, 96
        %v472 = vpop.permute.xlu0 %471
        %v473 = vrot.slane %v470, 4
        %v474 = vsel %vm331, %v473, %v470
        %v475 = vsel %vm331, %v473, %v472
        %v478 = vadd.f32 %v455, %v474
        %v479 = vadd.f32 %v456, %v475
        %v482 = vrot.slane %v270, 4
        %v483 = vsel %vm304, %v269, %v482
        %484 = vrot.lane.b32.xlu0 %v483, 113
        %v485 = vpop.permute.xlu0 %484
        %v486 = vrot.slane %v485, 4
        %vm487 = vcmask 924672
        %v488 = vsel %vm487, %v486, %v485
        %v491 = vmul.f32 %v478, %v488
        %v492 = vmul.f32 %v479, %v486
        %495 = vrot.lane.b32.xlu0 %v491, 126
        %v496 = vpop.permute.xlu0 %495
        %497 = vrot.lane.b32.xlu0 %v492, 126
        %v498 = vpop.permute.xlu0 %497
        %v499 = vrot.slane %v496, 4
        %v500 = vrot.slane %v498, 4
        %v501 = vsel %vm304, %v499, %v500
        %vm502 = vcmask 1031168
        %v503 = vsel %vm502, %v496, %v501
        %v506 = vadd.f32 %v420, %v503
        %v507 = vadd.f32 %v421, %v498
        %s508 = scalar_lea.vmem [#allocation2], 16
        %v509 = vld [vmem:[%s508] sm:$0xff]
        %v510 = vld [vmem:[%s508 + $0x8] sm:$0xf]
        %v511 = vmul.f32 %v509, %v280
        %v512 = vmul.f32 %v510, %v280
        %v513 = vadd.f32 %v511, 0.0
        %v514 = vadd.f32 %v512, 0.0
        %v515 = vmul.f32 %v509, %v292
        %v516 = vmul.f32 %v510, %v292
        %519 = vrot.lane.b32.xlu0 %v515, 112
        %v520 = vpop.permute.xlu0 %519
        %521 = vrot.lane.b32.xlu0 %v516, 112
        %v522 = vpop.permute.xlu0 %521
        %v523 = vrot.slane %v520, 4
        %v524 = vrot.slane %v522, 4
        %v525 = vsel %vm304, %v523, %v524
        %v526 = vsel %vm306, %v520, %v525
        %v529 = vadd.f32 %v513, %v526
        %v530 = vadd.f32 %v514, %v522
        %v531 = vld [vmem:[%s508 + $0x4] sm:$0xff]
        %v532 = vld [vmem:[%s508 + $0xc] sm:$0xf]
        %v533 = vmul.f32 %v531, %v320
        %v534 = vmul.f32 %v532, %v320
        %537 = vrot.lane.b32.xlu0 %v533, 96
        %v538 = vpop.permute.xlu0 %537
        %539 = vrot.lane.b32.xlu0 %v534, 96
        %v540 = vpop.permute.xlu0 %539
        %v541 = vrot.slane %v538, 4
        %v542 = vsel %vm331, %v541, %v538
        %v543 = vsel %vm331, %v541, %v540
        %v546 = vadd.f32 %v529, %v542
        %v547 = vadd.f32 %v530, %v543
        %v548 = vmul.f32 %v546, %v346
        %v549 = vmul.f32 %v547, %v344
        %v550 = vadd.f32 %v548, 0.0
        %v551 = vadd.f32 %v549, 0.0
        %v552 = vmul.f32 %v509, %v359
        %v553 = vmul.f32 %v510, %v359
        %v554 = vadd.f32 %v552, 0.0
        %v555 = vadd.f32 %v553, 0.0
        %v556 = vmul.f32 %v531, %v372
        %558 = vrot.lane.b32.xlu0 %v556, 112
        %v559 = vpop.permute.xlu0 %558
        %v560 = vrot.slane %v559, 4
        %v561 = vsel %vm306, %v560, %v559
        %v564 = vadd.f32 %v554, %v561
        %v565 = vadd.f32 %v555, %v560
        %v566 = vmul.f32 %v531, %v390
        %v567 = vmul.f32 %v532, %v390
        %570 = vrot.lane.b32.xlu0 %v566, 96
        %v571 = vpop.permute.xlu0 %570
        %572 = vrot.lane.b32.xlu0 %v567, 96
        %v573 = vpop.permute.xlu0 %572
        %v574 = vrot.slane %v571, 4
        %v575 = vsel %vm331, %v574, %v571
        %v576 = vsel %vm331, %v574, %v573
        %v579 = vadd.f32 %v564, %v575
        %v580 = vadd.f32 %v565, %v576
        %583 = vrot.lane.b32.xlu0 %v579, 127
        %v584 = vpop.permute.xlu0 %583
        %585 = vrot.lane.b32.xlu0 %v580, 127
        %v586 = vpop.permute.xlu0 %585
        %v587 = vrot.slane %v584, 4
        %v588 = vrot.slane %v586, 4
        %v589 = vsel %vm304, %v587, %v588
        %v590 = vsel %vm416, %v584, %v589
        %v593 = vadd.f32 %v550, %v590
        %v594 = vadd.f32 %v551, %v586
        %v595 = vmul.f32 %v509, %v428
        %v596 = vmul.f32 %v510, %v428
        %v597 = vadd.f32 %v595, 0.0
        %v598 = vadd.f32 %v596, 0.0
        %v599 = vmul.f32 %v531, %v440
        %v600 = vmul.f32 %v532, %v440
        %603 = vrot.lane.b32.xlu0 %v599, 112
        %v604 = vpop.permute.xlu0 %603
        %605 = vrot.lane.b32.xlu0 %v600, 112
        %v606 = vpop.permute.xlu0 %605
        %v607 = vrot.slane %v604, 4
        %v608 = vsel %vm306, %v607, %v604
        %v609 = vsel %vm306, %v607, %v606
        %v612 = vadd.f32 %v597, %v608
        %v613 = vadd.f32 %v598, %v609
        %v614 = vmul.f32 %v531, %v463
        %v615 = vmul.f32 %v532, %v463
        %618 = vrot.lane.b32.xlu0 %v614, 96
        %v619 = vpop.permute.xlu0 %618
        %620 = vrot.lane.b32.xlu0 %v615, 96
        %v621 = vpop.permute.xlu0 %620
        %v622 = vrot.slane %v619, 4
        %v623 = vsel %vm331, %v622, %v619
        %v624 = vsel %vm331, %v622, %v621
        %v627 = vadd.f32 %v612, %v623
        %v628 = vadd.f32 %v613, %v624
        %v629 = vmul.f32 %v627, %v488
        %v630 = vmul.f32 %v628, %v486
        %633 = vrot.lane.b32.xlu0 %v629, 126
        %v634 = vpop.permute.xlu0 %633
        %635 = vrot.lane.b32.xlu0 %v630, 126
        %v636 = vpop.permute.xlu0 %635
        %v637 = vrot.slane %v634, 4
        %v638 = vrot.slane %v636, 4
        %v639 = vsel %vm304, %v637, %v638
        %v640 = vsel %vm502, %v634, %v639
        %v643 = vadd.f32 %v593, %v640
        %v644 = vadd.f32 %v594, %v636
        %647 = vst [vmem:[#allocation1] ss:$2 sm:$0xff] %v506
        %s648 = scalar_lea.vmem [#allocation1], 16
        %649 = vst [vmem:[%s648] ss:$2 sm:$0xff] %v507
        %v650 = vld.sshfl [vmem:[#allocation1] sm:$0xff pattern:$0x75316420]
        %v651 = vld.sshfl [vmem:[#allocation1 + $0x8] sm:$0xff pattern:$0x75316420]
        %v652 = vld.sshfl [vmem:[#allocation1 + $0x10] sm:$0xff pattern:$0x75316420]
        %653 = vrot.lane.b32.xlu0 %v650, 17
        %v654 = vpop.permute.xlu0 %653
        %655 = vrot.lane.b32.xlu0 %v651, 17
        %v656 = vpop.permute.xlu0 %655
        %657 = vrot.lane.b32.xlu0 %v652, 17
        %v658 = vpop.permute.xlu0 %657
        %vm659 = vcmask 138240
        %v660 = vsel %vm659, %v654, %v656
        %v661 = vsel %vm659, %v656, %v658
        %666 = vst [vmem:[#allocation1] ss:$2 sm:$0xff] %v643
        %s667 = scalar_lea.vmem [#allocation1], 16
        %668 = vst [vmem:[%s667] ss:$2 sm:$0xff] %v644
        %v669 = vld.sshfl [vmem:[#allocation1] sm:$0xff pattern:$0x75316420]
        %v670 = vld.sshfl [vmem:[#allocation1 + $0x8] sm:$0xff pattern:$0x75316420]
        %v671 = vld.sshfl [vmem:[#allocation1 + $0x10] sm:$0xff pattern:$0x75316420]
        %672 = vrot.lane.b32.xlu0 %v669, 17
        %v673 = vpop.permute.xlu0 %672
        %674 = vrot.lane.b32.xlu0 %v670, 17
        %v675 = vpop.permute.xlu0 %674
        %676 = vrot.lane.b32.xlu0 %v671, 17
        %v677 = vpop.permute.xlu0 %676
        %v678 = vsel %vm659, %v673, %v675
        %v679 = vsel %vm659, %v675, %v677
        %v682 = vld [vmem:[%s2] sm:$0xf]
        %v683 = vpack.c.bf16 %v660, %v660
        %v684 = vpack.c.bf16 %v661, %v661
        %v685 = vpack.c.bf16 %v678, %v678
        %v686 = vpack.c.bf16 %v679, %v679
        %v687 = vld [vmem:[%s3] sm:$0xff]
        %689 = vset.pattern.permute.xlu0 0
        %690 = vperm.xlu0 %689, %v687
        %v691 = vpop.permute.xlu0 %690
        %vm693 = vcmask 31744
        %v695 = vsel %vm693, %v682, 0
        %vm697 = vcmask 1041408
        %v699 = vsel %vm697, %v683, 0
        %v702 = vsel %vm697, %v684, 0
        %v705 = vsel %vm697, %v685, 0
        %v708 = vsel %vm697, %v686, 0
        %710 = vmatpush.bf16.msra.mxu0 0
        %711 = vmatpush.bf16.msra.mxu0 0
        %712 = vmatpush.bf16.msra.mxu0 0
        %713 = vmatpush.bf16.msra.mxu0 0
        %714 = vmatpush.bf16.msra.mxu0 0
        %715 = vmatpush.bf16.msra.mxu0 0
        %716 = vmatpush.bf16.msra.mxu0 0
        %717 = vmatpush.bf16.msra.mxu0 %v699
        %718 = vmatmul.bf16.gmra.mxu0 %v695
        %v719 = vpop.f32.mrf.mxu0
        %v720 = vadd.f32 %v691, %v719
        %v721 = vpop.f32.mrf.mxu0
        %722 = vdwg.mxu0
        %723 = vmatpush.bf16.msra.mxu0 0
        %724 = vmatpush.bf16.msra.mxu0 0
        %725 = vmatpush.bf16.msra.mxu0 0
        %726 = vmatpush.bf16.msra.mxu0 0
        %727 = vmatpush.bf16.msra.mxu0 0
        %728 = vmatpush.bf16.msra.mxu0 0
        %729 = vmatpush.bf16.msra.mxu0 0
        %730 = vmatpush.bf16.msra.mxu0 %v702
        %731 = vmatmul.bf16.gmra.mxu0 %v695
        %v732 = vpop.f32.mrf.mxu0
        %v733 = vadd.f32 %v691, %v732
        %v734 = vpop.f32.mrf.mxu0
        %735 = vdwg.mxu0
        %736 = vmatpush.bf16.msra.mxu0 0
        %737 = vmatpush.bf16.msra.mxu0 0
        %738 = vmatpush.bf16.msra.mxu0 0
        %739 = vmatpush.bf16.msra.mxu0 0
        %740 = vmatpush.bf16.msra.mxu0 0
        %741 = vmatpush.bf16.msra.mxu0 0
        %742 = vmatpush.bf16.msra.mxu0 0
        %743 = vmatpush.bf16.msra.mxu0 %v705
        %744 = vmatmul.bf16.gmra.mxu0 %v695
        %v745 = vpop.f32.mrf.mxu0
        %v746 = vadd.f32 %v691, %v745
        %v747 = vpop.f32.mrf.mxu0
        %748 = vdwg.mxu0
        %749 = vmatpush.bf16.msra.mxu0 0
        %750 = vmatpush.bf16.msra.mxu0 0
        %751 = vmatpush.bf16.msra.mxu0 0
        %752 = vmatpush.bf16.msra.mxu0 0
        %753 = vmatpush.bf16.msra.mxu0 0
        %754 = vmatpush.bf16.msra.mxu0 0
        %755 = vmatpush.bf16.msra.mxu0 0
        %756 = vmatpush.bf16.msra.mxu0 %v708
        %757 = vmatmul.bf16.gmra.mxu0 %v695
        %v758 = vpop.f32.mrf.mxu0
        %v759 = vadd.f32 %v691, %v758
        %v760 = vpop.f32.mrf.mxu0
        %761 = vdwg.mxu0
        %v762 = vmax.f32 %v720, 0.0
        %v763 = vmax.f32 %v733, 0.0
        %v764 = vmax.f32 %v746, 0.0
        %v765 = vmax.f32 %v759, 0.0
        %766 = vst [vmem:[%s218] sm:$0xff] %v762
        %767 = vst [vmem:[%s218 + $0x8] sm:$0xff] %v763
        %s768 = scalar_lea.vmem %s218, 16 [#allocation6]
        %769 = vst [vmem:[%s768] sm:$0xff] %v764
        %770 = vst [vmem:[%s768 + $0x8] sm:$0xff] %v765
        %s771 = sand.u32 %s118, 1
        %s772 = scalar_lea.sflag [#allocation5], %s771
        %s773 = sand.u32 %s118, 1
        %s774 = smul.addr %s773, 32
        %s775 = scalar_lea.vmem [#allocation6], %s774
        // Predicated region
        $region41: #{tpu_custom_call.1} parent=35 // pred_check
          %p776 = pneg %p128
        $region42: #{tpu_custom_call.1} parent=35 // pred_check_branch
          %778 = sbr.rel (%p776) target = $region44
        $region43: #{tpu_custom_call.1} parent=35 // pred_region
          %s779 = smul.u32 2, %s21
          %781 = vsyncadd %s772, 0
          %s782 = smul.addr %s779, 2
          %s783 = smul.addr %s782, 8
          %s784 = scalar_lea.hbm %s4, %s783
          %s785 = sshll.u32 %s775, 4
          %s786 = int_to_ptr.vmem [resolvable:$true] %s785
          %s787 = sshll.u32 %s784, 4
          %s788 = int_to_ptr.hbm [resolvable:$true] %s787
          %793 = dma.vmem_to_hbm [thread:$0]  %s786, 512, %s788, %s772, 256, 256, 16
        $region44: #{tpu_custom_call.1} parent=35 // pred_fallthru
          _
      $region36: #{tpu_custom_call.1} parent=5 // pred_fallthru
        _
      %p794 = scmp.le.s32.totalorder 2, %s16
      // Predicated region
      $region45: #{tpu_custom_call.1} parent=5 // pred_check
        %p795 = pneg %p794
      $region46: #{tpu_custom_call.1} parent=5 // pred_check_branch
        %797 = sbr.rel (%p795) target = $region48
      $region47: #{tpu_custom_call.1} parent=5 // pred_region
        %s798 = ssub.s32 %s16, 2
        // Predicated region
        $region49: #{tpu_custom_call.1} parent=47 // pred_check
          %p799 = pneg %p134
        $region50: #{tpu_custom_call.1} parent=47 // pred_check_branch
          %801 = sbr.rel (%p799) target = $region52
        $region51: #{tpu_custom_call.1} parent=47 // pred_region
          %s802 = sand.u32 %s119, 1
          %s803 = scalar_lea.sflag [#allocation5], %s802
          %s804 = sand.u32 %s119, 1
          %s805 = smul.addr %s804, 32
          %s806 = scalar_lea.vmem [#allocation6], %s805
          %808 = dma.done %s803, 512
        $region52: #{tpu_custom_call.1} parent=47 // pred_fallthru
          _
      $region48: #{tpu_custom_call.1} parent=5 // pred_fallthru
        _
    $region6: #{tpu_custom_call.1} parent=1 // loop_footer
      %s20 = sadd.s32 1, %s16
    $region7: #{tpu_custom_call.1} parent=1 // loop_footer_branch
      %15 = sbr.rel target = $region3
    $region8: #{tpu_custom_call.1} parent=1 // loop_exit
      _
    %809 = vsyncpa [#allocation4], 1
    %s810 = scalar_lea.sflag [#allocation4], 1
    %811 = vsyncpa %s810, 1
    %812 = vsyncpa [#allocation5], 1
    %s813 = scalar_lea.sflag [#allocation5], 1
    %814 = vsyncpa %s813, 1

</llo_original>
